<compile_context>
chip_gen: v6e
topology: v6e:2x2x1
jax: 0.10.0
libtpu: 0.0.40
codegen_flags: <defaults>
</compile_context>

<pallas_src>
import math

import jax
import jax.numpy as jnp
from jax.experimental import pallas as pl
from jax.experimental.pallas import tpu as pltpu


# ----------------------------------------------------------------------------
# Tile / VMEM-limit helpers
# ----------------------------------------------------------------------------
# 512-class matmul tiles on every generation: working sets stay well under the
# scoped VMEM limit and the ~0.35us per-grid-step overhead is amortized.
_MM_TILES = (512, 512, 512)


def _pick_tile(dim, desired, align):
    """Largest tile <= desired that is `align`-aligned and divides `dim`;
    otherwise the full dim (a full-extent block is always legal)."""
    if dim <= desired:
        return dim
    t = (desired // align) * align
    while t >= align:
        if dim % t == 0:
            return t
        t -= align
    return dim


def _vmem_limit_bytes():
    try:
        cap = int(getattr(pltpu.get_tpu_info(), "vmem_capacity_bytes",
                          128 * 1024 * 1024))
    except Exception:
        cap = 128 * 1024 * 1024
    # Generous scoped limit, but leave headroom under physical VMEM
    # (128 MiB on v5e/v6e, 64 MiB per TensorCore on v7x).
    return int(min(cap * 3 // 4, 96 * 1024 * 1024))


# ----------------------------------------------------------------------------
# Kernel 1: tiled matmul with f32 VMEM accumulator (all linear projections)
# ----------------------------------------------------------------------------
def _matmul_kernel(x_ref, w_ref, o_ref, acc_ref):
    @pl.when(pl.program_id(2) == 0)
    def _init():
        acc_ref[...] = jnp.zeros_like(acc_ref)

    acc_ref[...] += jnp.dot(x_ref[...], w_ref[...],
                            preferred_element_type=jnp.float32)

    @pl.when(pl.program_id(2) == pl.num_programs(2) - 1)
    def _store():
        o_ref[...] = acc_ref[...].astype(o_ref.dtype)


def linear(x2d, w):
    """x2d: (M, K), w: (K, N) -> (M, N).  Tiled + pipelined matmul."""
    M, K = x2d.shape
    _, N = w.shape
    dm, dn, dk = _MM_TILES
    tm = _pick_tile(M, dm, 128)
    tn = _pick_tile(N, dn, 128)
    tk = _pick_tile(K, dk, 128)
    grid = (M // tm, N // tn, K // tk)
    isz = jnp.dtype(x2d.dtype).itemsize

    cost = pl.CostEstimate(
        flops=2 * M * N * K,
        transcendentals=0,
        bytes_accessed=isz * (M * K + K * N + M * N),
    )
    return pl.pallas_call(
        _matmul_kernel,
        out_shape=jax.ShapeDtypeStruct((M, N), x2d.dtype),
        grid_spec=pltpu.PrefetchScalarGridSpec(
            num_scalar_prefetch=0,
            grid=grid,
            in_specs=[
                pl.BlockSpec((tm, tk), lambda i, j, k: (i, k)),
                pl.BlockSpec((tk, tn), lambda i, j, k: (k, j)),
            ],
            out_specs=pl.BlockSpec((tm, tn), lambda i, j, k: (i, j)),
            scratch_shapes=[pltpu.VMEM((tm, tn), jnp.float32)],
        ),
        compiler_params=pltpu.CompilerParams(
            dimension_semantics=("parallel", "parallel", "arbitrary"),
            vmem_limit_bytes=_vmem_limit_bytes(),
        ),
        cost_estimate=cost,
    )(x2d, w)


def fused_qkv_projection(x2d, w_qkv, H):
    """x2d: (M, K), w_qkv: (K, 3H) -> (3, M, H), one tiled matmul.

    The output BlockSpec routes each N tile into the (proj, M, H) slab, so
    Q/K/V never exist as column slices of an (M, 3H) buffer in HBM.
    Requires H % 128 == 0 so the per-projection column tile is lane-legal.
    """
    M, K = x2d.shape
    N = w_qkv.shape[1]  # 3H
    dm, dn, dk = _MM_TILES
    tm = _pick_tile(M, dm, 128)
    tn = _pick_tile(H, dn, 128)   # tile within one projection's columns
    tk = _pick_tile(K, dk, 128)
    nj = H // tn                  # column blocks per projection
    grid = (M // tm, N // tn, K // tk)
    isz = jnp.dtype(x2d.dtype).itemsize

    cost = pl.CostEstimate(
        flops=2 * M * N * K,
        transcendentals=0,
        bytes_accessed=isz * (M * K + K * N + M * N),
    )
    return pl.pallas_call(
        _matmul_kernel,
        out_shape=jax.ShapeDtypeStruct((3, M, H), x2d.dtype),
        grid_spec=pltpu.PrefetchScalarGridSpec(
            num_scalar_prefetch=0,
            grid=grid,
            in_specs=[
                pl.BlockSpec((tm, tk), lambda i, j, k: (i, k)),
                pl.BlockSpec((tk, tn), lambda i, j, k: (k, j)),
            ],
            out_specs=pl.BlockSpec((None, tm, tn),
                                   lambda i, j, k: (j // nj, i, j % nj)),
            scratch_shapes=[pltpu.VMEM((tm, tn), jnp.float32)],
        ),
        compiler_params=pltpu.CompilerParams(
            dimension_semantics=("parallel", "parallel", "arbitrary"),
            vmem_limit_bytes=_vmem_limit_bytes(),
        ),
        cost_estimate=cost,
    )(x2d, w_qkv)


# ----------------------------------------------------------------------------
# Kernel 2: multi-head scaled dot-product attention (masked online softmax)
#   grid = (batch-tiles, Lq-tiles, Lk-tiles); all heads in one batched matmul;
#   flash-style f32 accumulators bound VMEM independently of Lk.
# ----------------------------------------------------------------------------
def _make_attention_kernel(num_heads):
    def kernel(vl_ref, q_ref, k_ref, v_ref, o_ref, m_sc, l_sc, acc_sc):
        Bt, Tq, H = q_ref.shape
        Tk = k_ref.shape[1]
        d = H // num_heads
        G = Bt * num_heads
        ki = pl.program_id(2)

        @pl.when(ki == 0)
        def _init():
            m_sc[...] = jnp.full_like(m_sc, -jnp.inf)
            l_sc[...] = jnp.zeros_like(l_sc)
            acc_sc[...] = jnp.zeros_like(acc_sc)

        # 1/sqrt(d) folded into q; operands stay in their native dtype
        # (the MXU accumulates in f32 via preferred_element_type).
        scale = jnp.asarray(1.0 / math.sqrt(d), dtype=q_ref.dtype)

        def to_heads(x, L):  # (Bt, L, H) -> (Bt*num_heads, L, d)
            x = x.reshape(Bt, L, num_heads, d)
            x = jnp.transpose(x, (0, 2, 1, 3))
            return x.reshape(G, L, d)

        q = to_heads(q_ref[...] * scale, Tq)
        k = to_heads(k_ref[...], Tk)
        v = to_heads(v_ref[...], Tk)

        # All heads in one batched contraction: (G, Tq, Tk) f32 scores.
        s = jnp.einsum("gqd,gkd->gqk", q, k,
                       preferred_element_type=jnp.float32)

        # masked_softmax: key positions >= valid_len are scored at -1e6
        # (d2l semantics; valid_len == 0 therefore gives a uniform softmax,
        # exactly like the reference).
        b0 = pl.program_id(0) * Bt
        vl = jax.lax.dynamic_slice(vl_ref[...], (b0, 0), (Bt, 1))   # (Bt, 1)
        vl = jnp.broadcast_to(vl.reshape(Bt, 1, 1, 1),
                              (Bt, num_heads, 1, 1)).reshape(G, 1, 1)
        col = Tk * ki + jax.lax.broadcasted_iota(jnp.int32, s.shape, 2)
        s = jnp.where(col < vl, s, jnp.float32(-1000000.0))

        # Online-softmax update across the Lk grid axis.
        m_prev = m_sc[...]
        m_new = jnp.maximum(m_prev, jnp.max(s, axis=-1, keepdims=True))
        alpha = jnp.exp(m_prev - m_new)
        p = jnp.exp(s - m_new)
        l_sc[...] = alpha * l_sc[...] + jnp.sum(p, axis=-1, keepdims=True)
        m_sc[...] = m_new
        # Dropout on the attention weights is the identity (eval / p == 0).
        acc_sc[...] = alpha * acc_sc[...] + jnp.einsum(
            "gqk,gkd->gqd", p.astype(v_ref.dtype), v,
            preferred_element_type=jnp.float32)

        @pl.when(ki == pl.num_programs(2) - 1)
        def _finalize():
            out = acc_sc[...] * pl.reciprocal(l_sc[...], approx=False)
            out = out.reshape(Bt, num_heads, Tq, d)
            out = jnp.transpose(out, (0, 2, 1, 3)).reshape(Bt, Tq, H)
            o_ref[...] = out.astype(o_ref.dtype)   # single lane-dense store

    return kernel


def _attention_tiles(B, Lq, Lk):
    Tq = _pick_tile(Lq, 256, 8)
    Tk = _pick_tile(Lk, 512, 128)
    # Batch several batches per grid step when sequences are short so the
    # ~0.35us per-step overhead and DMA setup are amortized.
    Bt = min(B, max(1, 256 // max(Tq, Tk)))
    while B % Bt != 0:
        Bt -= 1
    return Bt, Tq, Tk


def _attention_pallas(args, qkv_specs, B, Lq, Lk, H, num_heads,
                      Bt, Tq, Tk, dtype):
    d = H // num_heads
    G = Bt * num_heads
    grid = (B // Bt, Lq // Tq, Lk // Tk)
    isz = jnp.dtype(dtype).itemsize

    cost = pl.CostEstimate(
        flops=4 * B * Lq * Lk * H,
        transcendentals=B * num_heads * Lq * Lk,
        bytes_accessed=isz * (2 * B * Lq * H + 2 * B * Lk * H) + 4 * B,
    )
    # valid_lens stays fully resident (tiny) and is sliced per batch tile.
    vl_spec = pl.BlockSpec((B, 1), lambda b, qi, ki: (0, 0))
    out_spec = pl.BlockSpec((Bt, Tq, H), lambda b, qi, ki: (b, qi, 0))
    scratch = [
        pltpu.VMEM((G, Tq, 1), jnp.float32),   # running max
        pltpu.VMEM((G, Tq, 1), jnp.float32),   # running denominator
        pltpu.VMEM((G, Tq, d), jnp.float32),   # output accumulator
    ]
    return pl.pallas_call(
        _make_attention_kernel(num_heads),
        out_shape=jax.ShapeDtypeStruct((B, Lq, H), dtype),
        grid_spec=pltpu.PrefetchScalarGridSpec(
            num_scalar_prefetch=0,
            grid=grid,
            in_specs=[vl_spec] + qkv_specs,
            out_specs=out_spec,
            scratch_shapes=scratch,
        ),
        compiler_params=pltpu.CompilerParams(
            dimension_semantics=("parallel", "parallel", "arbitrary"),
            vmem_limit_bytes=_vmem_limit_bytes(),
        ),
        cost_estimate=cost,
    )(*args)


def mha_attention(q, k, v, vl2d, num_heads):
    """q: (B, Lq, H), k/v: (B, Lk, H), vl2d: (B, 1) int32 -> (B, Lq, H)."""
    B, Lq, H = q.shape
    Lk = k.shape[1]
    Bt, Tq, Tk = _attention_tiles(B, Lq, Lk)
    specs = [
        pl.BlockSpec((Bt, Tq, H), lambda b, qi, ki: (b, qi, 0)),
        pl.BlockSpec((Bt, Tk, H), lambda b, qi, ki: (b, ki, 0)),
        pl.BlockSpec((Bt, Tk, H), lambda b, qi, ki: (b, ki, 0)),
    ]
    return _attention_pallas((vl2d, q, k, v), specs, B, Lq, Lk, H,
                             num_heads, Bt, Tq, Tk, q.dtype)


def mha_attention_packed(qkv, vl2d, num_heads):
    """qkv: (3, B, L, H) fused-projection output (self-attention).
    Q/K/V selected zero-copy via the leading block index."""
    _, B, L, H = qkv.shape
    Bt, Tq, Tk = _attention_tiles(B, L, L)
    specs = [
        pl.BlockSpec((None, Bt, Tq, H), lambda b, qi, ki: (0, b, qi, 0)),
        pl.BlockSpec((None, Bt, Tk, H), lambda b, qi, ki: (1, b, ki, 0)),
        pl.BlockSpec((None, Bt, Tk, H), lambda b, qi, ki: (2, b, ki, 0)),
    ]
    return _attention_pallas((vl2d, qkv, qkv, qkv), specs, B, L, L, H,
                             num_heads, Bt, Tq, Tk, qkv.dtype)


# ----------------------------------------------------------------------------
# Full forward (matches MultiHeadAttention.forward, bias=False, eval mode)
# ----------------------------------------------------------------------------
def multi_head_attention(queries, keys, values, valid_lens, params, num_heads):
    B, Lq, qsize = queries.shape
    _, Lk, _ = keys.shape
    H = params["W_q"].shape[1]
    assert H % num_heads == 0

    self_attn = (queries is keys) and (keys is values) and ("W_qkv" in params)

    qkv_packed = None
    if self_attn:
        x2d = queries.reshape(-1, qsize)                       # (M, Kin)
        if H % 128 == 0:
            # Single matmul, output emitted directly as (3, M, H): no
            # activation stacking and no Q/K/V slice copies afterwards.
            qkv_packed = fused_qkv_projection(
                x2d, params["W_qkv"], H).reshape(3, B, Lq, H)
        else:
            # H is too narrow for a legal per-projection lane tile; do one
            # (M, 3H) matmul and take cheap (H < 128) column slices in XLA.
            qkv2d = linear(x2d, params["W_qkv"])               # (M, 3H)
            q = qkv2d[:, 0 * H:1 * H].reshape(B, Lq, H)
            k = qkv2d[:, 1 * H:2 * H].reshape(B, Lq, H)
            v = qkv2d[:, 2 * H:3 * H].reshape(B, Lq, H)
    else:
        q = linear(queries.reshape(-1, qsize), params["W_q"]).reshape(B, Lq, H)
        k = linear(keys.reshape(-1, keys.shape[-1]),
                   params["W_k"]).reshape(B, Lk, H)
        v = linear(values.reshape(-1, values.shape[-1]),
                   params["W_v"]).reshape(B, Lk, H)

    if valid_lens is None:
        vl = jnp.full((B,), Lk, dtype=jnp.int32)
    else:
        if valid_lens.ndim != 1:
            # TODO(synk): 2-D per-query valid_lens (masked_softmax's other
            # branch) is not implemented in-kernel; only 1-D / None supported.
            raise NotImplementedError("only 1-D valid_lens (or None) supported")
        vl = valid_lens.astype(jnp.int32)
    vl2d = vl.reshape(B, 1)

    if qkv_packed is not None:
        out = mha_attention_packed(qkv_packed, vl2d, num_heads)   # (B, Lq, H)
    else:
        out = mha_attention(q, k, v, vl2d, num_heads)             # (B, Lq, H)

    return linear(out.reshape(-1, H), params["W_o"]).reshape(B, Lq, H)


# ----------------------------------------------------------------------------
# Deterministic parameter init (nn.Linear-style uniform, stored as (in, out));
# the fused QKV weight is pre-concatenated ONCE here, not per forward call.
# ----------------------------------------------------------------------------
def init_params(key, key_size, query_size, value_size, num_hiddens):
    ks = jax.random.split(key, 4)

    def mk(k, fan_in, fan_out):
        bound = 1.0 / math.sqrt(fan_in)
        return jax.random.uniform(
            k, (fan_in, fan_out), jnp.float32, minval=-bound, maxval=bound)

    params = {
        "W_q": mk(ks[0], query_size, num_hiddens),
        "W_k": mk(ks[1], key_size, num_hiddens),
        "W_v": mk(ks[2], value_size, num_hiddens),
        "W_o": mk(ks[3], num_hiddens, num_hiddens),
    }
    if key_size == query_size == value_size:
        params["W_qkv"] = jnp.concatenate(
            [params["W_q"], params["W_k"], params["W_v"]], axis=1)
    return params


# ----------------------------------------------------------------------------
# Pure-JAX reference (mirrors the PyTorch module, for correctness checks)
# ----------------------------------------------------------------------------
def _transpose_qkv(x, num_heads):
    B, L, H = x.shape
    x = x.reshape(B, L, num_heads, H // num_heads).transpose(0, 2, 1, 3)
    return x.reshape(B * num_heads, L, H // num_heads)


def _transpose_output(x, num_heads):
    BH, L, d = x.shape
    x = x.reshape(BH // num_heads, num_heads, L, d).transpose(0, 2, 1, 3)
    return x.reshape(BH // num_heads, L, num_heads * d)


def reference_mha(queries, keys, values, valid_lens, params, num_heads):
    q = _transpose_qkv(queries @ params["W_q"], num_heads)
    k = _transpose_qkv(keys @ params["W_k"], num_heads)
    v = _transpose_qkv(values @ params["W_v"], num_heads)
    vl = jnp.repeat(valid_lens.astype(jnp.int32), num_heads, axis=0)
    d = q.shape[-1]
    scores = jnp.einsum("bqd,bkd->bqk", q, k) / math.sqrt(d)
    col = jnp.arange(scores.shape[-1])[None, None, :]
    scores = jnp.where(col < vl[:, None, None], scores, -1000000.0)
    p = jax.nn.softmax(scores, axis=-1)
    out = jnp.einsum("bqk,bkd->bqd", p, v)
    return _transpose_output(out, num_heads) @ params["W_o"]


if __name__ == "__main__":
    root = jax.random.PRNGKey(0)
    k1, k2, k3, k4, k5, k6 = jax.random.split(root, 6)

    B, Lq, Lk = 2, 8, 8
    valid_lens = jnp.array([3, 6], dtype=jnp.int32)

    def check(out, ref, shape):
        assert out.shape == shape
        assert jnp.allclose(out, ref, atol=2e-3, rtol=2e-3), float(
            jnp.max(jnp.abs(out - ref)))

    # --- 1. Cross-attention, H=32 (separate projection matmuls) -------------
    H1, nh1, in1 = 32, 4, 32
    params1 = init_params(k1, in1, in1, in1, H1)
    q_in = jax.random.normal(k2, (B, Lq, in1), jnp.float32)
    k_in = jax.random.normal(k3, (B, Lk, in1), jnp.float32)
    v_in = jax.random.normal(k4, (B, Lk, in1), jnp.float32)
    out1 = jax.block_until_ready(
        multi_head_attention(q_in, k_in, v_in, valid_lens, params1, nh1))
    check(out1, reference_mha(q_in, k_in, v_in, valid_lens, params1, nh1),
          (B, Lq, H1))

    # --- 2. Self-attention, H=32 (packed (Kin, 3H) weight, one matmul) ------
    x = jax.random.normal(k5, (B, Lq, in1), jnp.float32)
    out2 = jax.block_until_ready(
        multi_head_attention(x, x, x, valid_lens, params1, nh1))
    check(out2, reference_mha(x, x, x, valid_lens, params1, nh1), (B, Lq, H1))

    # --- 3. Self-attention, H=128 (fused (3,M,H) projection + packed attn) --
    H3, nh3, in3 = 128, 4, 128
    params3 = init_params(k6, in3, in3, in3, H3)
    x3 = jax.random.normal(k2, (B, Lq, in3), jnp.float32)
    out3 = jax.block_until_ready(
        multi_head_attention(x3, x3, x3, valid_lens, params3, nh3))
    check(out3, reference_mha(x3, x3, x3, valid_lens, params3, nh3),
          (B, Lq, H3))

    print("KERNEL_OK")
</pallas_src>

<mosaic_0001>
module attributes {stable_mosaic.version = 11 : i64} {
  func.func @_matmul_kernel(%arg0: i32, %arg1: i32, %arg2: i32, %arg3: memref<16x32xf32, #tpu.memory_space<vmem>>, %arg4: memref<32x32xf32, #tpu.memory_space<vmem>>, %arg5: memref<16x32xf32, #tpu.memory_space<vmem>>, %arg6: memref<16x32xf32, #tpu.memory_space<vmem>>) attributes {dimension_semantics = [#tpu.dimension_semantics<parallel>, #tpu.dimension_semantics<parallel>, #tpu.dimension_semantics<arbitrary>], iteration_bounds = array<i64: 1, 1, 1>, scalar_prefetch = 0 : i64, scratch_operands = 1 : i64, tpu.core_type = #tpu.core_type<tc>, window_params = [{transform_indices = @transform_0, window_bounds = array<i64: 16, 32>}, {transform_indices = @transform_1, window_bounds = array<i64: 32, 32>}, {transform_indices = @transform_2, window_bounds = array<i64: 16, 32>}]} {
    %c0_i32 = arith.constant 0 : i32
    %0 = arith.cmpi eq, %arg2, %c0_i32 : i32
    %1 = arith.extui %0 : i1 to i32
    %c0_i32_0 = arith.constant 0 : i32
    %2 = arith.cmpi ne, %1, %c0_i32_0 : i32
    scf.if %2 {
      %cst_10 = arith.constant 0.000000e+00 : f32
      %12 = vector.broadcast %cst_10 : f32 to vector<16x32xf32>
      %c0_11 = arith.constant 0 : index
      %c0_12 = arith.constant 0 : index
      %13 = vector.load %arg6[%c0_11, %c0_12] : memref<16x32xf32, #tpu.memory_space<vmem>>, vector<16x32xf32>
      tpu.vector_store %arg6[%c0_11, %c0_12], %12 {strides = array<i32>} : memref<16x32xf32, #tpu.memory_space<vmem>>, vector<16x32xf32>,
    } else {
    }
    %c0 = arith.constant 0 : index
    %c0_1 = arith.constant 0 : index
    %3 = vector.load %arg6[%c0, %c0_1] : memref<16x32xf32, #tpu.memory_space<vmem>>, vector<16x32xf32>
    %c0_2 = arith.constant 0 : index
    %c0_3 = arith.constant 0 : index
    %4 = vector.load %arg3[%c0_2, %c0_3] : memref<16x32xf32, #tpu.memory_space<vmem>>, vector<16x32xf32>
    %c0_4 = arith.constant 0 : index
    %c0_5 = arith.constant 0 : index
    %5 = vector.load %arg4[%c0_4, %c0_5] : memref<32x32xf32, #tpu.memory_space<vmem>>, vector<32x32xf32>
    %cst = arith.constant dense<0.000000e+00> : vector<16x32xf32>
    %6 = tpu.matmul %4, %5, %cst {dimension_numbers = #tpu.dot_dimension_numbers<[1], [0], [0], [1], [0, 0, 1, 1], [], []>} : vector<16x32xf32>, vector<32x32xf32>, vector<16x32xf32> -> vector<16x32xf32>
    %7 = arith.addf %3, %6 : vector<16x32xf32>
    %c0_6 = arith.constant 0 : index
    %c0_7 = arith.constant 0 : index
    %8 = vector.load %arg6[%c0_6, %c0_7] : memref<16x32xf32, #tpu.memory_space<vmem>>, vector<16x32xf32>
    tpu.vector_store %arg6[%c0_6, %c0_7], %7 {strides = array<i32>} : memref<16x32xf32, #tpu.memory_space<vmem>>, vector<16x32xf32>,
    %c0_i32_8 = arith.constant 0 : i32
    %9 = arith.cmpi eq, %arg2, %c0_i32_8 : i32
    %10 = arith.extui %9 : i1 to i32
    %c0_i32_9 = arith.constant 0 : i32
    %11 = arith.cmpi ne, %10, %c0_i32_9 : i32
    scf.if %11 {
      %c0_10 = arith.constant 0 : index
      %c0_11 = arith.constant 0 : index
      %12 = vector.load %arg6[%c0_10, %c0_11] : memref<16x32xf32, #tpu.memory_space<vmem>>, vector<16x32xf32>
      %c0_12 = arith.constant 0 : index
      %c0_13 = arith.constant 0 : index
      %13 = vector.load %arg5[%c0_12, %c0_13] : memref<16x32xf32, #tpu.memory_space<vmem>>, vector<16x32xf32>
      tpu.vector_store %arg5[%c0_12, %c0_13], %12 {strides = array<i32>} : memref<16x32xf32, #tpu.memory_space<vmem>>, vector<16x32xf32>,
    } else {
    }
    return
  }
  func.func @transform_0(%arg0: i32, %arg1: i32, %arg2: i32) -> (i32, i32) {
    %c0_i32 = arith.constant 0 : i32
    return %arg0, %arg2 : i32, i32
  }
  func.func @transform_1(%arg0: i32, %arg1: i32, %arg2: i32) -> (i32, i32) {
    %c0_i32 = arith.constant 0 : i32
    return %arg2, %arg1 : i32, i32
  }
  func.func @transform_2(%arg0: i32, %arg1: i32, %arg2: i32) -> (i32, i32) {
    %c0_i32 = arith.constant 0 : i32
    return %arg0, %arg1 : i32, i32
  }
}

</mosaic_0001>

<llo_original>
// kernel: tpu_custom_call.1
$region0: #{tpu_custom_call.1}
  #allocation0 [shape = 'u32[]', space=smem, size = 0x4, offset = 0x4, fixed_abs, tag = 'smem constant byte address 0x4 - core index']
  #allocation1 [shape = 'u32[144,128]{1,0:T(1,128)}', space=vmem, size = 0x12000, scoped, tag = 'internal scratch']
  #allocation2 [shape = 'f32[16,32]{1,0:T(8,128)}', space=vmem, size = 0x2000, scoped, tag = 'scratch operand']
  %s0 = inlined_call_operand.hbm [shape: f32[16,32], index: 0, kind: input, shape index: {}]
  %s1 = inlined_call_operand.hbm [shape: f32[32,32], index: 1, kind: input, shape index: {}]
  %s2 = inlined_call_operand.hbm [shape: f32[16,32], index: 2, kind: output, shape index: {}]
  %s3 = sld [smem:[#allocation0]]
  $region34: #{tpu_custom_call.1} parent=0
    _
  %s5 = ssub.s32 1, %s3
  %s6 = scalar_select 0, %s5, %s3
  $region1: #{tpu_custom_call.1} parent=0
    #allocation3 [shape = 'u8[8192]{0}', space=vmem, size = 0x2000, scoped, tag = 'input window, operand 0, single buffered']
    #allocation4 [shape = 's32[1]{0}', space=sflag, size = 0x4, scoped, tag = 'scoped memory for tpu_custom_call.1']
    #allocation5 [shape = 's32[1]{0}', space=sflag, size = 0x4, scoped, tag = 'scoped memory for tpu_custom_call.1']
    #allocation6 [shape = 'u8[16384]{0}', space=vmem, size = 0x4000, scoped, tag = 'input window, operand 1, single buffered']
    #allocation7 [shape = 's32[1]{0}', space=sflag, size = 0x4, scoped, tag = 'scoped memory for tpu_custom_call.1']
    #allocation8 [shape = 'u8[8192]{0}', space=vmem, size = 0x2000, scoped, tag = 'output window, operand 0, single buffered']
    %7 = vsyncpa [#allocation4], 0
    %8 = vsyncpa [#allocation7], 0
    %9 = vsyncpa [#allocation5], 0
    // Predicated region
    $region2: #{tpu_custom_call.1} parent=1 // pred_check
      _
    $region3: #{tpu_custom_call.1} parent=1 // pred_check_branch
      %11 = sbr.rel (0) target = $region5
    $region4: #{tpu_custom_call.1} parent=1 // pred_region
      %s13 = ssub.s32 256, 256
      %14 = vsyncadd [#allocation4], %s13
      %s15 = sshll.u32 [#allocation3], 4
      %s16 = int_to_ptr.vmem [resolvable:$true] %s15
      %21 = dma.hbm_to_vmem [thread:$0]  %s0, 256, %s16, [#allocation4], 128, 128, 8
    $region5: #{tpu_custom_call.1} parent=1 // pred_fallthru
      _
    // Predicated region
    $region6: #{tpu_custom_call.1} parent=1 // pred_check
      _
    $region7: #{tpu_custom_call.1} parent=1 // pred_check_branch
      %23 = sbr.rel (0) target = $region9
    $region8: #{tpu_custom_call.1} parent=1 // pred_region
      %s25 = ssub.s32 512, 512
      %26 = vsyncadd [#allocation7], %s25
      %s27 = sshll.u32 [#allocation6], 4
      %s28 = int_to_ptr.vmem [resolvable:$true] %s27
      %33 = dma.hbm_to_vmem [thread:$0]  %s1, 512, %s28, [#allocation7], 128, 128, 8
    $region9: #{tpu_custom_call.1} parent=1 // pred_fallthru
      _
    // Predicated region
    $region10: #{tpu_custom_call.1} parent=1 // pred_check
      _
    $region11: #{tpu_custom_call.1} parent=1 // pred_check_branch
      %35 = sbr.rel (0) target = $region13
    $region12: #{tpu_custom_call.1} parent=1 // pred_region
      %36 = dma.done [#allocation4], 256
    $region13: #{tpu_custom_call.1} parent=1 // pred_fallthru
      _
    // Predicated region
    $region14: #{tpu_custom_call.1} parent=1 // pred_check
      _
    $region15: #{tpu_custom_call.1} parent=1 // pred_check_branch
      %38 = sbr.rel (0) target = $region17
    $region16: #{tpu_custom_call.1} parent=1 // pred_region
      %39 = dma.done [#allocation7], 512
    $region17: #{tpu_custom_call.1} parent=1 // pred_fallthru
      _
    %p40 = scmp.eq.s32.totalorder 0, 0
    // Predicated region
    $region18: #{tpu_custom_call.1} parent=1 // pred_check
      %p41 = pneg %p40
    $region19: #{tpu_custom_call.1} parent=1 // pred_check_branch
      %43 = sbr.rel (%p41) target = $region21
    $region20: #{tpu_custom_call.1} parent=1 // pred_region
      %vm44 = vcmask 261120
      %45 = vst.msk [vmem:[#allocation2] sm:$0xff] %vm44, 0.0
      %46 = vst.msk [vmem:[#allocation2 + $0x8] sm:$0xff] %vm44, 0.0
    $region21: #{tpu_custom_call.1} parent=1 // pred_fallthru
      _
    %v47 = vld [vmem:[#allocation2] sm:$0xff]
    %v48 = vld [vmem:[#allocation2 + $0x8] sm:$0xff]
    %v49 = vld [vmem:[#allocation3] sm:$0xff]
    %v50 = vld [vmem:[#allocation3 + $0x8] sm:$0xff]
    %v51 = vld [vmem:[#allocation6] sm:$0xff]
    %v52 = vld [vmem:[#allocation6 + $0x8] sm:$0xff]
    %v53 = vld [vmem:[#allocation6 + $0x10] sm:$0xff]
    %v54 = vld [vmem:[#allocation6 + $0x18] sm:$0xff]
    %vm55 = vcmask 261120
    %v57 = vsel %vm55, %v49, 0
    %v60 = vsel %vm55, %v50, 0
    %62 = vmatprep.subr.mxu0 0.0
    %63 = vmatpush1.msra.mxu0 0.0
    %64 = vmatprep.subr.mxu0 0.0
    %65 = vmatpush1.msra.mxu0 0.0
    %66 = vmatprep.subr.mxu0 0.0
    %67 = vmatpush1.msra.mxu0 0.0
    %68 = vmatprep.subr.mxu0 0.0
    %69 = vmatpush1.msra.mxu0 0.0
    %70 = vmatprep.subr.mxu0 0.0
    %71 = vmatpush1.msra.mxu0 0.0
    %72 = vmatprep.subr.mxu0 0.0
    %73 = vmatpush1.msra.mxu0 0.0
    %74 = vmatprep.subr.mxu0 0.0
    %75 = vmatpush1.msra.mxu0 0.0
    %76 = vmatprep.subr.mxu0 0.0
    %77 = vmatpush1.msra.mxu0 0.0
    %78 = vmatprep.subr.mxu0 0.0
    %79 = vmatpush1.msra.mxu0 0.0
    %80 = vmatprep.subr.mxu0 0.0
    %81 = vmatpush1.msra.mxu0 0.0
    %82 = vmatprep.subr.mxu0 0.0
    %83 = vmatpush1.msra.mxu0 0.0
    %84 = vmatprep.subr.mxu0 0.0
    %85 = vmatpush1.msra.mxu0 0.0
    %86 = vmatprep.subr.mxu0 0.0
    %87 = vmatpush1.msra.mxu0 %v54
    %88 = vmatprep.subr.mxu0 0.0
    %89 = vmatpush1.msra.mxu0 %v53
    %90 = vmatprep.subr.mxu0 0.0
    %91 = vmatpush1.msra.mxu0 %v52
    %92 = vmatprep.subr.mxu0 0.0
    %93 = vmatpush1.msra.mxu0 %v51
    %94 = vmatprep.subr.mxu0 0.0
    %95 = vmatpush2.msra.mxu0 0.0
    %96 = vmatprep.subr.mxu0 0.0
    %97 = vmatpush2.msra.mxu0 0.0
    %98 = vmatprep.subr.mxu0 0.0
    %99 = vmatpush2.msra.mxu0 0.0
    %100 = vmatprep.subr.mxu0 0.0
    %101 = vmatpush2.msra.mxu0 0.0
    %102 = vmatprep.subr.mxu0 0.0
    %103 = vmatpush2.msra.mxu0 0.0
    %104 = vmatprep.subr.mxu0 0.0
    %105 = vmatpush2.msra.mxu0 0.0
    %106 = vmatprep.subr.mxu0 0.0
    %107 = vmatpush2.msra.mxu0 0.0
    %108 = vmatprep.subr.mxu0 0.0
    %109 = vmatpush2.msra.mxu0 0.0
    %110 = vmatprep.subr.mxu0 0.0
    %111 = vmatpush2.msra.mxu0 0.0
    %112 = vmatprep.subr.mxu0 0.0
    %113 = vmatpush2.msra.mxu0 0.0
    %114 = vmatprep.subr.mxu0 0.0
    %115 = vmatpush2.msra.mxu0 0.0
    %116 = vmatprep.subr.mxu0 0.0
    %117 = vmatpush2.msra.mxu0 0.0
    %118 = vmatprep.subr.mxu0 0.0
    %119 = vmatpush2.msra.mxu0 0.0
    %120 = vmatprep.subr.mxu0 0.0
    %121 = vmatpush2.msra.mxu0 0.0
    %122 = vmatprep.subr.mxu0 0.0
    %123 = vmatpush2.msra.mxu0 0.0
    %124 = vmatprep.subr.mxu0 0.0
    %125 = vmatpush2.msra.mxu0 0.0
    %126 = vmatprep.mubr.f32.mxu0 0.0
    %127 = vmatmul.mubr.f32.gmra.mxu0 %v57
    %v128 = vpop.f32.mrf.mxu0
    %v129 = vadd.f32 0.0, %v128
    %v130 = vpop.f32.mrf.mxu0
    %131 = vmatprep.mubr.f32.mxu0 0.0
    %132 = vmatmul.mubr.f32.gmra.mxu0 %v60
    %v133 = vpop.f32.mrf.mxu0
    %v134 = vadd.f32 0.0, %v133
    %v135 = vpop.f32.mrf.mxu0
    %136 = vdwg.mxu0
    %v137 = vadd.f32 %v47, %v129
    %v138 = vadd.f32 %v48, %v134
    %139 = vst.msk [vmem:[#allocation2] sm:$0xff] %vm55, %v137
    %140 = vst.msk [vmem:[#allocation2 + $0x8] sm:$0xff] %vm55, %v138
    // Predicated region
    $region22: #{tpu_custom_call.1} parent=1 // pred_check
      %p141 = pneg %p40
    $region23: #{tpu_custom_call.1} parent=1 // pred_check_branch
      %143 = sbr.rel (%p141) target = $region25
    $region24: #{tpu_custom_call.1} parent=1 // pred_region
      %v144 = vld [vmem:[#allocation2] sm:$0xff]
      %v145 = vld [vmem:[#allocation2 + $0x8] sm:$0xff]
      %146 = vst.msk [vmem:[#allocation8] sm:$0xff] %vm55, %v144
      %147 = vst.msk [vmem:[#allocation8 + $0x8] sm:$0xff] %vm55, %v145
    $region25: #{tpu_custom_call.1} parent=1 // pred_fallthru
      _
    // Predicated region
    $region26: #{tpu_custom_call.1} parent=1 // pred_check
      _
    $region27: #{tpu_custom_call.1} parent=1 // pred_check_branch
      %149 = sbr.rel (0) target = $region29
    $region28: #{tpu_custom_call.1} parent=1 // pred_region
      %s151 = ssub.s32 256, 256
      %152 = vsyncadd [#allocation5], %s151
      %s153 = sshll.u32 [#allocation8], 4
      %s154 = int_to_ptr.vmem [resolvable:$true] %s153
      %159 = dma.vmem_to_hbm [thread:$0]  %s154, 256, %s2, [#allocation5], 128, 128, 8
    $region29: #{tpu_custom_call.1} parent=1 // pred_fallthru
      _
    // Predicated region
    $region30: #{tpu_custom_call.1} parent=1 // pred_check
      _
    $region31: #{tpu_custom_call.1} parent=1 // pred_check_branch
      %161 = sbr.rel (0) target = $region33
    $region32: #{tpu_custom_call.1} parent=1 // pred_region
      %162 = dma.done [#allocation5], 256
    $region33: #{tpu_custom_call.1} parent=1 // pred_fallthru
      _
    %163 = vsyncpa [#allocation4], 1
    %164 = vsyncpa [#allocation7], 1
    %165 = vsyncpa [#allocation5], 1

</llo_original>
